<compile_context>
chip_gen: v6e
topology: v6e:2x2x1
jax: 0.10.0
libtpu: 0.0.40
codegen_flags: <defaults>
</compile_context>

<pallas_src>
import math
import jax
import jax.numpy as jnp
from jax import lax
from jax.experimental import pallas as pl
from jax.experimental.pallas import tpu as pltpu


def _round_up(a, b):
    return (a + b - 1) // b * b


def _iqn_kernel(x_ref, tau_ref, freq_ref,
                w1_ref, b1_ref, w2_ref, b2_ref,
                w3_ref, b3_ref, wpT_ref, bpT_ref,
                a1_ref, a2_ref,
                out_ref):
    cdt = w1_ref.dtype                          # MXU operand dtype (bf16 or f32)

    tau = tau_ref[...]                          # (TN, 1) f32
    # cos embedding: cos(tau * (arange(C) * pi)); freq row precomputed outside.
    cos_emb = jnp.cos(tau * freq_ref[...])      # (TN, C) f32

    # QuantileLayer.output_layer: Linear(C,C) -> PReLU -> Linear(C,F)
    h1 = jnp.dot(cos_emb.astype(cdt), w1_ref[...],
                 preferred_element_type=jnp.float32) + b1_ref[...]
    a1 = a1_ref[0]                              # scalar PReLU slope from SMEM
    h1 = jnp.where(h1 > 0, h1, a1 * h1)
    emb_taus = jnp.dot(h1.astype(cdt), w2_ref[...],
                       preferred_element_type=jnp.float32) + b2_ref[...]   # (TN, F)

    # emb_inputs = inputs * (1 + emb_taus); x may be streamed as bf16 -> fp32.
    emb_in = x_ref[...].astype(jnp.float32) * (1.0 + emb_taus)

    # output_layer: Linear(F,F) -> PReLU
    h2 = jnp.dot(emb_in.astype(cdt), w3_ref[...],
                 preferred_element_type=jnp.float32) + b3_ref[...]
    a2 = a2_ref[0]
    h2 = jnp.where(h2 > 0, h2, a2 * h2)

    # Stacked projections, K-major: (KP, F) x (TN, F) contracted on F -> (KP, TN).
    # Lane axis of the output block is the row tile -> unmasked full-lane stores
    # without padding K up to 128 lanes.
    outT = lax.dot_general(wpT_ref[...], h2.astype(cdt),
                           dimension_numbers=(((1,), (1,)), ((), ())),
                           preferred_element_type=jnp.float32)
    out_ref[...] = outT + bpT_ref[...]


def _resolve_dtypes(compute_dtype, input_dtype):
    if compute_dtype is None:
        kind = ""
        try:
            kind = jax.devices()[0].device_kind.lower()
        except Exception:
            pass
        old_gen = any(t in kind for t in ("v2", "v3", "v4", "v5 lite", "v5e", "v5lite"))
        compute_dtype = jnp.float32 if old_gen else jnp.bfloat16
    if input_dtype is None:
        # bf16 x halves the dominant HBM read regardless of generation.
        input_dtype = jnp.bfloat16
    return compute_dtype, input_dtype


def _pick_row_tile(N):
    # Multi-step grids need row_tile % 128 == 0 (output lane dim) and % 8 == 0
    # (input sublane dim).  Single-step grids use the full array (any N).
    if N >= 4096:
        return 1024
    if N >= 1024:
        return 512
    if N >= 256:
        return 128        # >= 2 grid steps so both v7x TensorCores get work
    return N              # single block == full array dims


def iqn_forward(inputs, taus, params, *, compute_dtype=None, input_dtype=None):
    """inputs: (B, T, F); taus: (B, T). Returns (out_0, ..., out_{K-1}, taus)."""
    compute_dtype, input_dtype = _resolve_dtypes(compute_dtype, input_dtype)

    B, T, F = inputs.shape
    N = B * T
    (w1, b1, a1, w2, b2, w3, b3, a2, wp, bp) = params
    C = w1.shape[0]
    K = wp.shape[1]
    KP = max(8, _round_up(K, 8))      # sublane-aligned projection count

    row_tile = _pick_row_tile(N)
    grid = (pl.cdiv(N, row_tile),)

    # No wrapper-side padding of x / tau: Pallas handles the ragged last block
    # (rows are independent; the partial output block is masked on store).
    x = inputs.reshape(N, F)
    if x.dtype != input_dtype:
        x = x.astype(input_dtype)
    tau = taus.reshape(N, 1)
    if tau.dtype != jnp.float32:
        tau = tau.astype(jnp.float32)

    # K-major projection weights / bias, sublane-padded K -> KP with zeros.
    wpT = jnp.zeros((KP, F), wp.dtype).at[:K, :].set(wp.T)
    bpT = jnp.zeros((KP, 1), bp.dtype).at[:K, :].set(bp.T)

    # MXU operands in compute_dtype; biases / elementwise path stay fp32.
    w1c = w1.astype(compute_dtype)
    w2c = w2.astype(compute_dtype)
    w3c = w3.astype(compute_dtype)
    wpTc = wpT.astype(compute_dtype)

    # Precomputed cos-embedding frequency row: arange(C) * pi.
    freq = (jnp.arange(C, dtype=jnp.float32) * jnp.pi).reshape(1, C)

    # PReLU slopes as SMEM scalars.
    a1s = a1.reshape(1).astype(jnp.float32)
    a2s = a2.reshape(1).astype(jnp.float32)

    def const2d(arr):
        return pl.BlockSpec(arr.shape, lambda i: (0, 0))

    smem_spec = pl.BlockSpec(memory_space=pltpu.MemorySpace.SMEM)

    out = pl.pallas_call(
        _iqn_kernel,
        out_shape=jax.ShapeDtypeStruct((KP, N), jnp.float32),
        grid_spec=pltpu.PrefetchScalarGridSpec(
            num_scalar_prefetch=0,
            grid=grid,
            in_specs=[
                pl.BlockSpec((row_tile, F), lambda i: (i, 0)),   # input rows
                pl.BlockSpec((row_tile, 1), lambda i: (i, 0)),   # taus rows
                const2d(freq),
                const2d(w1c), const2d(b1),
                const2d(w2c), const2d(b2),
                const2d(w3c), const2d(b3),
                const2d(wpTc), const2d(bpT),
                smem_spec, smem_spec,                            # PReLU slopes
            ],
            out_specs=pl.BlockSpec((KP, row_tile), lambda i: (0, i)),
        ),
        compiler_params=pltpu.CompilerParams(
            dimension_semantics=("parallel",)),
    )(x, tau, freq, w1c, b1, w2c, b2, w3c, b3, wpTc, bpT, a1s, a2s)

    out = out[:K, :].reshape(K, B, T)
    outputs = tuple(out[k] for k in range(K))   # each proj had out dim 1 -> squeeze(-1)
    # TODO(synk): domain_map / output_domain_map are user-supplied callables; identity here.
    return (*outputs, taus)


def _reference(inputs, taus, params):
    (w1, b1, a1, w2, b2, w3, b3, a2, wp, bp) = params
    C = w1.shape[0]

    def mm(a, b):
        return jnp.matmul(a, b, precision=lax.Precision.HIGHEST)

    cos_emb = jnp.cos(taus[..., None] * (jnp.arange(C, dtype=jnp.float32) * jnp.pi))
    h1 = mm(cos_emb, w1) + b1[0]
    h1 = jnp.where(h1 > 0, h1, a1[0, 0] * h1)
    emb_taus = mm(h1, w2) + b2[0]
    emb_in = inputs * (1.0 + emb_taus)
    h2 = mm(emb_in, w3) + b3[0]
    h2 = jnp.where(h2 > 0, h2, a2[0, 0] * h2)
    out = mm(h2, wp) + bp[0]
    return tuple(out[..., k] for k in range(out.shape[-1])) + (taus,)


def _init_params(key, in_features, cos_dim, num_proj):
    """Deterministic init mimicking nn.Linear default U(-1/sqrt(fan_in), +);
    PReLU slope = 0.25.  Weights stored as (in, out)."""
    ks = jax.random.split(key, 3 + num_proj)

    def lin(k, fan_in, fan_out):
        kw, kb = jax.random.split(k)
        bound = 1.0 / math.sqrt(fan_in)
        w = jax.random.uniform(kw, (fan_in, fan_out), jnp.float32, -bound, bound)
        b = jax.random.uniform(kb, (1, fan_out), jnp.float32, -bound, bound)
        return w, b

    w1, b1 = lin(ks[0], cos_dim, cos_dim)          # QuantileLayer Linear 1
    w2, b2 = lin(ks[1], cos_dim, in_features)      # QuantileLayer Linear 2
    w3, b3 = lin(ks[2], in_features, in_features)  # output_layer Linear
    wps, bps = [], []
    for j in range(num_proj):                      # proj Linears F->1, stacked
        w, b = lin(ks[3 + j], in_features, 1)
        wps.append(w)
        bps.append(b)
    wp = jnp.concatenate(wps, axis=1)
    bp = jnp.concatenate(bps, axis=1)
    a1 = jnp.full((1, 1), 0.25, jnp.float32)       # PReLU slopes
    a2 = jnp.full((1, 1), 0.25, jnp.float32)
    return (w1, b1, a1, w2, b2, w3, b3, a2, wp, bp)


if __name__ == "__main__":
    COS_DIM = 64                # cos_embedding_dim of ImplicitQuantileModule
    K = 2                       # args_dim = {"loc": 1, "scale": 1}

    key = jax.random.PRNGKey(0)
    k_in, k_tau, k_par, k2_in, k2_tau, k3_in, k3_tau = jax.random.split(key, 7)

    # --- small toy shape: single grid step (block == full array) ---
    B, T, F = 2, 8, 32
    inputs = jax.random.normal(k_in, (B, T, F), jnp.float32)
    taus = jax.random.uniform(k_tau, (B, T), jnp.float32)   # eval-mode rand / Beta(1,1)
    params = _init_params(k_par, F, COS_DIM, K)
    ref = _reference(inputs, taus, params)

    # fp32 everywhere: tight match to the fp32 reference
    out32 = jax.block_until_ready(
        iqn_forward(inputs, taus, params,
                    compute_dtype=jnp.float32, input_dtype=jnp.float32))
    for a, b in zip(out32, ref):
        assert a.shape == b.shape
        assert jnp.allclose(a, b, atol=2e-3, rtol=2e-3)

    # default dtypes (bf16 x stream; bf16 MXU operands on v6e/v7x): looser tolerance
    out16 = jax.block_until_ready(iqn_forward(inputs, taus, params))
    for a, b in zip(out16, ref):
        assert a.shape == b.shape
        assert jnp.allclose(a, b, atol=5e-2, rtol=5e-2)

    # --- moderate shape: 128-row tiles, grid=(6,), ragged last block (N=650) ---
    B2, T2 = 5, 130
    inputs2 = jax.random.normal(k2_in, (B2, T2, F), jnp.float32)
    taus2 = jax.random.uniform(k2_tau, (B2, T2), jnp.float32)
    ref2 = _reference(inputs2, taus2, params)
    out2 = jax.block_until_ready(
        iqn_forward(inputs2, taus2, params,
                    compute_dtype=jnp.float32, input_dtype=jnp.float32))
    for a, b in zip(out2, ref2):
        assert a.shape == b.shape
        assert jnp.allclose(a, b, atol=2e-3, rtol=2e-3)

    # --- larger shape: 512-row tiles, grid=(3,), ragged last block (N=1200) ---
    B3, T3 = 4, 300
    inputs3 = jax.random.normal(k3_in, (B3, T3, F), jnp.float32)
    taus3 = jax.random.uniform(k3_tau, (B3, T3), jnp.float32)
    ref3 = _reference(inputs3, taus3, params)
    out3 = jax.block_until_ready(
        iqn_forward(inputs3, taus3, params,
                    compute_dtype=jnp.float32, input_dtype=jnp.float32))
    for a, b in zip(out3, ref3):
        assert a.shape == b.shape
        assert jnp.allclose(a, b, atol=2e-3, rtol=2e-3)

    print("KERNEL_OK")
</pallas_src>

<mosaic_0001>
module attributes {stable_mosaic.version = 11 : i64} {
  func.func @_iqn_kernel(%arg0: i32, %arg1: memref<16x32xf32, #tpu.memory_space<vmem>>, %arg2: memref<16x1xf32, #tpu.memory_space<vmem>>, %arg3: memref<1x64xf32, #tpu.memory_space<vmem>>, %arg4: memref<64x64xf32, #tpu.memory_space<vmem>>, %arg5: memref<1x64xf32, #tpu.memory_space<vmem>>, %arg6: memref<64x32xf32, #tpu.memory_space<vmem>>, %arg7: memref<1x32xf32, #tpu.memory_space<vmem>>, %arg8: memref<32x32xf32, #tpu.memory_space<vmem>>, %arg9: memref<1x32xf32, #tpu.memory_space<vmem>>, %arg10: memref<8x32xf32, #tpu.memory_space<vmem>>, %arg11: memref<8x1xf32, #tpu.memory_space<vmem>>, %arg12: memref<1xf32, #tpu.memory_space<smem>>, %arg13: memref<1xf32, #tpu.memory_space<smem>>, %arg14: memref<8x16xf32, #tpu.memory_space<vmem>>) attributes {dimension_semantics = [#tpu.dimension_semantics<parallel>], iteration_bounds = array<i64: 1>, scalar_prefetch = 0 : i64, scratch_operands = 0 : i64, tpu.core_type = #tpu.core_type<tc>, window_params = [{transform_indices = @transform_0, window_bounds = array<i64: 16, 32>}, {transform_indices = @transform_1, window_bounds = array<i64: 16, 1>}, {pipeline_mode = #tpu.pipeline_mode<synchronous>, transform_indices = @transform_2, window_bounds = array<i64: 1, 64>}, {pipeline_mode = #tpu.pipeline_mode<synchronous>, transform_indices = @transform_3, window_bounds = array<i64: 64, 64>}, {pipeline_mode = #tpu.pipeline_mode<synchronous>, transform_indices = @transform_4, window_bounds = array<i64: 1, 64>}, {pipeline_mode = #tpu.pipeline_mode<synchronous>, transform_indices = @transform_5, window_bounds = array<i64: 64, 32>}, {pipeline_mode = #tpu.pipeline_mode<synchronous>, transform_indices = @transform_6, window_bounds = array<i64: 1, 32>}, {pipeline_mode = #tpu.pipeline_mode<synchronous>, transform_indices = @transform_7, window_bounds = array<i64: 32, 32>}, {pipeline_mode = #tpu.pipeline_mode<synchronous>, transform_indices = @transform_8, window_bounds = array<i64: 1, 32>}, {pipeline_mode = #tpu.pipeline_mode<synchronous>, transform_indices = @transform_9, window_bounds = array<i64: 8, 32>}, {pipeline_mode = #tpu.pipeline_mode<synchronous>, transform_indices = @transform_10, window_bounds = array<i64: 8, 1>}, {transform_indices = @transform_11, window_bounds = array<i64: 1>}, {transform_indices = @transform_12, window_bounds = array<i64: 1>}, {transform_indices = @transform_13, window_bounds = array<i64: 8, 16>}]} {
    %c0 = arith.constant 0 : index
    %c0_0 = arith.constant 0 : index
    %0 = vector.load %arg2[%c0, %c0_0] : memref<16x1xf32, #tpu.memory_space<vmem>>, vector<16x1xf32>
    %c0_1 = arith.constant 0 : index
    %c0_2 = arith.constant 0 : index
    %1 = vector.load %arg3[%c0_1, %c0_2] : memref<1x64xf32, #tpu.memory_space<vmem>>, vector<1x64xf32>
    %2 = vector.broadcast %0 : vector<16x1xf32> to vector<16x64xf32>
    %3 = vector.broadcast %1 : vector<1x64xf32> to vector<16x64xf32>
    %4 = arith.mulf %2, %3 : vector<16x64xf32>
    %5 = math.cos %4 : vector<16x64xf32>
    %c0_3 = arith.constant 0 : index
    %c0_4 = arith.constant 0 : index
    %6 = vector.load %arg4[%c0_3, %c0_4] : memref<64x64xf32, #tpu.memory_space<vmem>>, vector<64x64xf32>
    %cst = arith.constant dense<0.000000e+00> : vector<16x64xf32>
    %7 = tpu.matmul %5, %6, %cst {dimension_numbers = #tpu.dot_dimension_numbers<[1], [0], [0], [1], [0, 0, 1, 1], [], []>} : vector<16x64xf32>, vector<64x64xf32>, vector<16x64xf32> -> vector<16x64xf32>
    %c0_5 = arith.constant 0 : index
    %c0_6 = arith.constant 0 : index
    %8 = vector.load %arg5[%c0_5, %c0_6] : memref<1x64xf32, #tpu.memory_space<vmem>>, vector<1x64xf32>
    %9 = vector.broadcast %8 : vector<1x64xf32> to vector<16x64xf32>
    %10 = arith.addf %7, %9 : vector<16x64xf32>
    %c0_7 = arith.constant 0 : index
    %11 = memref.load %arg12[%c0_7] : memref<1xf32, #tpu.memory_space<smem>>
    %cst_8 = arith.constant 0.000000e+00 : f32
    %12 = vector.broadcast %cst_8 : f32 to vector<16x64xf32>
    %13 = arith.cmpf ogt, %10, %12 : vector<16x64xf32>
    %14 = vector.broadcast %11 : f32 to vector<16x64xf32>
    %15 = arith.mulf %14, %10 : vector<16x64xf32>
    %16 = arith.select %13, %10, %15 : vector<16x64xi1>, vector<16x64xf32>
    %c0_9 = arith.constant 0 : index
    %c0_10 = arith.constant 0 : index
    %17 = vector.load %arg6[%c0_9, %c0_10] : memref<64x32xf32, #tpu.memory_space<vmem>>, vector<64x32xf32>
    %cst_11 = arith.constant dense<0.000000e+00> : vector<16x32xf32>
    %18 = tpu.matmul %16, %17, %cst_11 {dimension_numbers = #tpu.dot_dimension_numbers<[1], [0], [0], [1], [0, 0, 1, 1], [], []>} : vector<16x64xf32>, vector<64x32xf32>, vector<16x32xf32> -> vector<16x32xf32>
    %c0_12 = arith.constant 0 : index
    %c0_13 = arith.constant 0 : index
    %19 = vector.load %arg7[%c0_12, %c0_13] : memref<1x32xf32, #tpu.memory_space<vmem>>, vector<1x32xf32>
    %20 = vector.broadcast %19 : vector<1x32xf32> to vector<16x32xf32>
    %21 = arith.addf %18, %20 : vector<16x32xf32>
    %c0_14 = arith.constant 0 : index
    %c0_15 = arith.constant 0 : index
    %22 = vector.load %arg1[%c0_14, %c0_15] : memref<16x32xf32, #tpu.memory_space<vmem>>, vector<16x32xf32>
    %cst_16 = arith.constant 1.000000e+00 : f32
    %23 = vector.broadcast %cst_16 : f32 to vector<16x32xf32>
    %24 = arith.addf %23, %21 : vector<16x32xf32>
    %25 = arith.mulf %22, %24 : vector<16x32xf32>
    %c0_17 = arith.constant 0 : index
    %c0_18 = arith.constant 0 : index
    %26 = vector.load %arg8[%c0_17, %c0_18] : memref<32x32xf32, #tpu.memory_space<vmem>>, vector<32x32xf32>
    %cst_19 = arith.constant dense<0.000000e+00> : vector<16x32xf32>
    %27 = tpu.matmul %25, %26, %cst_19 {dimension_numbers = #tpu.dot_dimension_numbers<[1], [0], [0], [1], [0, 0, 1, 1], [], []>} : vector<16x32xf32>, vector<32x32xf32>, vector<16x32xf32> -> vector<16x32xf32>
    %c0_20 = arith.constant 0 : index
    %c0_21 = arith.constant 0 : index
    %28 = vector.load %arg9[%c0_20, %c0_21] : memref<1x32xf32, #tpu.memory_space<vmem>>, vector<1x32xf32>
    %29 = vector.broadcast %28 : vector<1x32xf32> to vector<16x32xf32>
    %30 = arith.addf %27, %29 : vector<16x32xf32>
    %c0_22 = arith.constant 0 : index
    %31 = memref.load %arg13[%c0_22] : memref<1xf32, #tpu.memory_space<smem>>
    %cst_23 = arith.constant 0.000000e+00 : f32
    %32 = vector.broadcast %cst_23 : f32 to vector<16x32xf32>
    %33 = arith.cmpf ogt, %30, %32 : vector<16x32xf32>
    %34 = vector.broadcast %31 : f32 to vector<16x32xf32>
    %35 = arith.mulf %34, %30 : vector<16x32xf32>
    %36 = arith.select %33, %30, %35 : vector<16x32xi1>, vector<16x32xf32>
    %c0_24 = arith.constant 0 : index
    %c0_25 = arith.constant 0 : index
    %37 = vector.load %arg10[%c0_24, %c0_25] : memref<8x32xf32, #tpu.memory_space<vmem>>, vector<8x32xf32>
    %cst_26 = arith.constant dense<0.000000e+00> : vector<8x16xf32>
    %38 = tpu.matmul %37, %36, %cst_26 {dimension_numbers = #tpu.dot_dimension_numbers<[1], [1], [0], [0], [0, 0, 1, 0], [], []>} : vector<8x32xf32>, vector<16x32xf32>, vector<8x16xf32> -> vector<8x16xf32>
    %c0_27 = arith.constant 0 : index
    %c0_28 = arith.constant 0 : index
    %39 = vector.load %arg11[%c0_27, %c0_28] : memref<8x1xf32, #tpu.memory_space<vmem>>, vector<8x1xf32>
    %40 = vector.broadcast %39 : vector<8x1xf32> to vector<8x16xf32>
    %41 = arith.addf %38, %40 : vector<8x16xf32>
    %c0_29 = arith.constant 0 : index
    %c0_30 = arith.constant 0 : index
    %42 = vector.load %arg14[%c0_29, %c0_30] : memref<8x16xf32, #tpu.memory_space<vmem>>, vector<8x16xf32>
    tpu.vector_store %arg14[%c0_29, %c0_30], %41 {strides = array<i32>} : memref<8x16xf32, #tpu.memory_space<vmem>>, vector<8x16xf32>,
    return
  }
  func.func @transform_0(%arg0: i32) -> (i32, i32) {
    %c0_i32 = arith.constant 0 : i32
    %c0_i32_0 = arith.constant 0 : i32
    return %arg0, %c0_i32 : i32, i32
  }
  func.func @transform_1(%arg0: i32) -> (i32, i32) {
    %c0_i32 = arith.constant 0 : i32
    %c0_i32_0 = arith.constant 0 : i32
    return %arg0, %c0_i32 : i32, i32
  }
  func.func @transform_2(%arg0: i32) -> (i32, i32) {
    %c0_i32 = arith.constant 0 : i32
    %c0_i32_0 = arith.constant 0 : i32
    %c0_i32_1 = arith.constant 0 : i32
    return %c0_i32, %c0_i32_0 : i32, i32
  }
  func.func @transform_3(%arg0: i32) -> (i32, i32) {
    %c0_i32 = arith.constant 0 : i32
    %c0_i32_0 = arith.constant 0 : i32
    %c0_i32_1 = arith.constant 0 : i32
    return %c0_i32, %c0_i32_0 : i32, i32
  }
  func.func @transform_4(%arg0: i32) -> (i32, i32) {
    %c0_i32 = arith.constant 0 : i32
    %c0_i32_0 = arith.constant 0 : i32
    %c0_i32_1 = arith.constant 0 : i32
    return %c0_i32, %c0_i32_0 : i32, i32
  }
  func.func @transform_5(%arg0: i32) -> (i32, i32) {
    %c0_i32 = arith.constant 0 : i32
    %c0_i32_0 = arith.constant 0 : i32
    %c0_i32_1 = arith.constant 0 : i32
    return %c0_i32, %c0_i32_0 : i32, i32
  }
  func.func @transform_6(%arg0: i32) -> (i32, i32) {
    %c0_i32 = arith.constant 0 : i32
    %c0_i32_0 = arith.constant 0 : i32
    %c0_i32_1 = arith.constant 0 : i32
    return %c0_i32, %c0_i32_0 : i32, i32
  }
  func.func @transform_7(%arg0: i32) -> (i32, i32) {
    %c0_i32 = arith.constant 0 : i32
    %c0_i32_0 = arith.constant 0 : i32
    %c0_i32_1 = arith.constant 0 : i32
    return %c0_i32, %c0_i32_0 : i32, i32
  }
  func.func @transform_8(%arg0: i32) -> (i32, i32) {
    %c0_i32 = arith.constant 0 : i32
    %c0_i32_0 = arith.constant 0 : i32
    %c0_i32_1 = arith.constant 0 : i32
    return %c0_i32, %c0_i32_0 : i32, i32
  }
  func.func @transform_9(%arg0: i32) -> (i32, i32) {
    %c0_i32 = arith.constant 0 : i32
    %c0_i32_0 = arith.constant 0 : i32
    %c0_i32_1 = arith.constant 0 : i32
    return %c0_i32, %c0_i32_0 : i32, i32
  }
  func.func @transform_10(%arg0: i32) -> (i32, i32) {
    %c0_i32 = arith.constant 0 : i32
    %c0_i32_0 = arith.constant 0 : i32
    %c0_i32_1 = arith.constant 0 : i32
    return %c0_i32, %c0_i32_0 : i32, i32
  }
  func.func @transform_11(%arg0: i32) -> i32 {
    %c0_i32 = arith.constant 0 : i32
    %c0_i32_0 = arith.constant 0 : i32
    return %c0_i32 : i32
  }
  func.func @transform_12(%arg0: i32) -> i32 {
    %c0_i32 = arith.constant 0 : i32
    %c0_i32_0 = arith.constant 0 : i32
    return %c0_i32 : i32
  }
  func.func @transform_13(%arg0: i32) -> (i32, i32) {
    %c0_i32 = arith.constant 0 : i32
    %c0_i32_0 = arith.constant 0 : i32
    return %c0_i32, %arg0 : i32, i32
  }
}

</mosaic_0001>

<llo_original>
// kernel: tpu_custom_call.1
$region0: #{tpu_custom_call.1}
  #allocation0 [shape = 'u32[]', space=smem, size = 0x4, offset = 0x4, fixed_abs, tag = 'smem constant byte address 0x4 - core index']
  #allocation1 [shape = 'u32[144,128]{1,0:T(1,128)}', space=vmem, size = 0x12000, scoped, tag = 'internal scratch']
  #allocation2 [shape = 'f32[1]{0:T(128)S(6)}', space=smem, size = 0x200, scoped, tag = 'scoped memory for tpu_custom_call.1']
  #allocation3 [shape = 'f32[1]{0:T(128)S(6)}', space=smem, size = 0x200, scoped, tag = 'scoped memory for tpu_custom_call.1']
  %s0 = inlined_call_operand.hbm [shape: f32[16,32], index: 0, kind: input, shape index: {}]
  %s1 = inlined_call_operand.vmem [shape: f32[16,1], index: 1, kind: input, shape index: {}]
  %s2 = inlined_call_operand.hbm [shape: f32[1,64], index: 2, kind: input, shape index: {}]
  %s3 = inlined_call_operand.vmem [shape: f32[64,64], index: 3, kind: input, shape index: {}]
  %s4 = inlined_call_operand.hbm [shape: f32[1,64], index: 4, kind: input, shape index: {}]
  %s5 = inlined_call_operand.vmem [shape: f32[64,32], index: 5, kind: input, shape index: {}]
  %s6 = inlined_call_operand.hbm [shape: f32[1,32], index: 6, kind: input, shape index: {}]
  %s7 = inlined_call_operand.vmem [shape: f32[32,32], index: 7, kind: input, shape index: {}]
  %s8 = inlined_call_operand.vmem [shape: f32[1,32], index: 8, kind: input, shape index: {}]
  %s9 = inlined_call_operand.vmem [shape: f32[8,32], index: 9, kind: input, shape index: {}]
  %s10 = inlined_call_operand.vmem [shape: f32[8,1], index: 10, kind: input, shape index: {}]
  %s11 = inlined_call_operand.<no memory space> [shape: f32[1], index: 11, kind: input, shape index: {}]
  %s12 = inlined_call_operand.<no memory space> [shape: f32[1], index: 12, kind: input, shape index: {}]
  %s13 = inlined_call_operand.hbm [shape: f32[8,16], index: 13, kind: output, shape index: {}]
  %s14 = sld [smem:[#allocation0]]
  $region78: #{tpu_custom_call.1} parent=0
    _
  %s16 = ssub.s32 1, %s14
  %s17 = scalar_select 0, %s16, %s14
  %18 = sst [smem:[#allocation2]] %s11
  %19 = sst [smem:[#allocation3]] %s12
  $region1: #{tpu_custom_call.1} parent=0
    #allocation4 [shape = 'u8[8192]{0}', space=vmem, size = 0x2000, scoped, tag = 'input window, operand 0, single buffered']
    #allocation5 [shape = 's32[1]{0}', space=sflag, size = 0x4, scoped, tag = 'scoped memory for tpu_custom_call.1']
    #allocation6 [shape = 's32[1]{0}', space=sflag, size = 0x4, scoped, tag = 'scoped memory for tpu_custom_call.1']
    #allocation7 [shape = 'u8[512]{0}', space=vmem, size = 0x400, scoped, tag = 'input window, operand 2, single buffered']
    #allocation8 [shape = 's32[1]{0}', space=sflag, size = 0x4, scoped, tag = 'scoped memory for tpu_custom_call.1']
    #allocation9 [shape = 'u8[512]{0}', space=vmem, size = 0x400, scoped, tag = 'input window, operand 4, single buffered']
    #allocation10 [shape = 'u8[512]{0}', space=vmem, size = 0x400, scoped, tag = 'input window, operand 6, single buffered']
    #allocation11 [shape = 's32[1]{0}', space=sflag, size = 0x4, scoped, tag = 'scoped memory for tpu_custom_call.1']
    #allocation12 [shape = 'u8[4096]{0}', space=vmem, size = 0x1000, scoped, tag = 'output window, operand 0, single buffered']
    %20 = vsyncpa [#allocation5], 0
    %21 = vsyncpa [#allocation8], 0
    %22 = vsyncpa [#allocation11], 0
    %23 = vsyncpa [#allocation6], 0
    // Predicated region
    $region2: #{tpu_custom_call.1} parent=1 // pred_check
      _
    $region3: #{tpu_custom_call.1} parent=1 // pred_check_branch
      %25 = sbr.rel (0) target = $region5
    $region4: #{tpu_custom_call.1} parent=1 // pred_region
      %s27 = ssub.s32 256, 256
      %28 = vsyncadd [#allocation5], %s27
      %s29 = sshll.u32 [#allocation4], 4
      %s30 = int_to_ptr.vmem [resolvable:$true] %s29
      %35 = dma.hbm_to_vmem [thread:$0]  %s0, 256, %s30, [#allocation5], 128, 128, 8
    $region5: #{tpu_custom_call.1} parent=1 // pred_fallthru
      _
    // Predicated region
    $region6: #{tpu_custom_call.1} parent=1 // pred_check
      _
    $region7: #{tpu_custom_call.1} parent=1 // pred_check_branch
      %37 = sbr.rel (0) target = $region9
    $region8: #{tpu_custom_call.1} parent=1 // pred_region
      _
    $region9: #{tpu_custom_call.1} parent=1 // pred_fallthru
      _
    // Predicated region
    $region10: #{tpu_custom_call.1} parent=1 // pred_check
      _
    $region11: #{tpu_custom_call.1} parent=1 // pred_check_branch
      %39 = sbr.rel (0) target = $region13
    $region12: #{tpu_custom_call.1} parent=1 // pred_region
      %s41 = ssub.s32 16, 16
      %42 = vsyncadd [#allocation8], %s41
      %s44 = sshll.u32 [#allocation7], 4
      %s45 = int_to_ptr.vmem [resolvable:$true] %s44
      %47 = dma.hbm_to_vmem [thread:$0]  %s2, 16, %s45, [#allocation8]
    $region13: #{tpu_custom_call.1} parent=1 // pred_fallthru
      _
    // Predicated region
    $region14: #{tpu_custom_call.1} parent=1 // pred_check
      _
    $region15: #{tpu_custom_call.1} parent=1 // pred_check_branch
      %49 = sbr.rel (0) target = $region17
    $region16: #{tpu_custom_call.1} parent=1 // pred_region
      _
    $region17: #{tpu_custom_call.1} parent=1 // pred_fallthru
      _
    // Predicated region
    $region18: #{tpu_custom_call.1} parent=1 // pred_check
      _
    $region19: #{tpu_custom_call.1} parent=1 // pred_check_branch
      %51 = sbr.rel (0) target = $region21
    $region20: #{tpu_custom_call.1} parent=1 // pred_region
      %s53 = ssub.s32 16, 16
      %54 = vsyncadd [#allocation8], %s53
      %s56 = sshll.u32 [#allocation9], 4
      %s57 = int_to_ptr.vmem [resolvable:$true] %s56
      %59 = dma.hbm_to_vmem [thread:$0]  %s4, 16, %s57, [#allocation8]
    $region21: #{tpu_custom_call.1} parent=1 // pred_fallthru
      _
    // Predicated region
    $region22: #{tpu_custom_call.1} parent=1 // pred_check
      _
    $region23: #{tpu_custom_call.1} parent=1 // pred_check_branch
      %61 = sbr.rel (0) target = $region25
    $region24: #{tpu_custom_call.1} parent=1 // pred_region
      _
    $region25: #{tpu_custom_call.1} parent=1 // pred_fallthru
      _
    // Predicated region
    $region26: #{tpu_custom_call.1} parent=1 // pred_check
      _
    $region27: #{tpu_custom_call.1} parent=1 // pred_check_branch
      %63 = sbr.rel (0) target = $region29
    $region28: #{tpu_custom_call.1} parent=1 // pred_region
      %s65 = ssub.s32 16, 16
      %66 = vsyncadd [#allocation11], %s65
      %s68 = sshll.u32 [#allocation10], 4
      %s69 = int_to_ptr.vmem [resolvable:$true] %s68
      %71 = dma.hbm_to_vmem [thread:$0]  %s6, 16, %s69, [#allocation11]
    $region29: #{tpu_custom_call.1} parent=1 // pred_fallthru
      _
    // Predicated region
    $region30: #{tpu_custom_call.1} parent=1 // pred_check
      _
    $region31: #{tpu_custom_call.1} parent=1 // pred_check_branch
      %73 = sbr.rel (0) target = $region33
    $region32: #{tpu_custom_call.1} parent=1 // pred_region
      _
    $region33: #{tpu_custom_call.1} parent=1 // pred_fallthru
      _
    // Predicated region
    $region34: #{tpu_custom_call.1} parent=1 // pred_check
      _
    $region35: #{tpu_custom_call.1} parent=1 // pred_check_branch
      %75 = sbr.rel (0) target = $region37
    $region36: #{tpu_custom_call.1} parent=1 // pred_region
      _
    $region37: #{tpu_custom_call.1} parent=1 // pred_fallthru
      _
    // Predicated region
    $region38: #{tpu_custom_call.1} parent=1 // pred_check
      _
    $region39: #{tpu_custom_call.1} parent=1 // pred_check_branch
      %77 = sbr.rel (0) target = $region41
    $region40: #{tpu_custom_call.1} parent=1 // pred_region
      _
    $region41: #{tpu_custom_call.1} parent=1 // pred_fallthru
      _
    // Predicated region
    $region42: #{tpu_custom_call.1} parent=1 // pred_check
      _
    $region43: #{tpu_custom_call.1} parent=1 // pred_check_branch
      %79 = sbr.rel (0) target = $region45
    $region44: #{tpu_custom_call.1} parent=1 // pred_region
      _
    $region45: #{tpu_custom_call.1} parent=1 // pred_fallthru
      _
    // Predicated region
    $region46: #{tpu_custom_call.1} parent=1 // pred_check
      _
    $region47: #{tpu_custom_call.1} parent=1 // pred_check_branch
      %81 = sbr.rel (0) target = $region49
    $region48: #{tpu_custom_call.1} parent=1 // pred_region
      _
    $region49: #{tpu_custom_call.1} parent=1 // pred_fallthru
      _
    // Predicated region
    $region50: #{tpu_custom_call.1} parent=1 // pred_check
      _
    $region51: #{tpu_custom_call.1} parent=1 // pred_check_branch
      %83 = sbr.rel (0) target = $region53
    $region52: #{tpu_custom_call.1} parent=1 // pred_region
      _
    $region53: #{tpu_custom_call.1} parent=1 // pred_fallthru
      _
    // Predicated region
    $region54: #{tpu_custom_call.1} parent=1 // pred_check
      _
    $region55: #{tpu_custom_call.1} parent=1 // pred_check_branch
      %85 = sbr.rel (0) target = $region57
    $region56: #{tpu_custom_call.1} parent=1 // pred_region
      %86 = dma.done [#allocation5], 256
    $region57: #{tpu_custom_call.1} parent=1 // pred_fallthru
      _
    // Predicated region
    $region58: #{tpu_custom_call.1} parent=1 // pred_check
      _
    $region59: #{tpu_custom_call.1} parent=1 // pred_check_branch
      %88 = sbr.rel (0) target = $region61
    $region60: #{tpu_custom_call.1} parent=1 // pred_region
      %89 = dma.done [#allocation8], 16
    $region61: #{tpu_custom_call.1} parent=1 // pred_fallthru
      _
    // Predicated region
    $region62: #{tpu_custom_call.1} parent=1 // pred_check
      _
    $region63: #{tpu_custom_call.1} parent=1 // pred_check_branch
      %91 = sbr.rel (0) target = $region65
    $region64: #{tpu_custom_call.1} parent=1 // pred_region
      %92 = dma.done [#allocation8], 16
    $region65: #{tpu_custom_call.1} parent=1 // pred_fallthru
      _
    // Predicated region
    $region66: #{tpu_custom_call.1} parent=1 // pred_check
      _
    $region67: #{tpu_custom_call.1} parent=1 // pred_check_branch
      %94 = sbr.rel (0) target = $region69
    $region68: #{tpu_custom_call.1} parent=1 // pred_region
      %95 = dma.done [#allocation11], 16
    $region69: #{tpu_custom_call.1} parent=1 // pred_fallthru
      _
    %v96 = vld [vmem:[%s1] sm:$0xff]
    %v97 = vld [vmem:[%s1 + $0x8] sm:$0xff]
    %v98 = vld [vmem:[#allocation7] sm:$0x1]
    %100 = vset.pattern.permute.xlu0 0
    %101 = vperm.xlu0 %100, %v96
    %v102 = vpop.permute.xlu0 %101
    %105 = vset.pattern.permute.xlu0 0
    %106 = vperm.xlu0 %105, %v97
    %v107 = vpop.permute.xlu0 %106
    %v110 = vlaneseq
    %v111 = vshrl.u32 %v110, 7
    %v112 = vsub.s32 0, %v111
    %v113 = vrot.slane %v98, %v112
    %v115 = vmul.f32 %v102, %v113
    %v116 = vmul.f32 %v107, %v113
    %v117 = vand.u32 2147483647, %v115
    %vm118 = vcmp.le.f32.partialorder %v117, 0.7853982
    %vm119 = vcmp.lt.s32.totalorder %v115, 0
    %v120 = vand.u32 %v115, 2139095040
    %v121 = vshrl.u32 %v120, 23
    %v122 = vsub.s32 %v121, 127
    %v123 = vand.u32 2147483647, %v115
    %v124 = vand.u32 %v123, 8388607
    %v125 = vor.u32 %v124, 8388608
    %v126 = vsub.s32 0, %v125
    %v127 = vadd.s32 %v122, 1
    %vm128 = vcmp.gt.s32.totalorder %v127, 0
    %v129 = vsel %vm128, %v127, 0
    %v130 = vshrl.u32 %v129, 5
    %v131 = vand.u32 %v129, 31
    %v132 = vsub.s32 32, %v131
    %v133 = vshrl.u32 683565275, %v132
    %v134 = vshll.u32 683565275, %v131
    %v135 = vshrl.u32 2475754826, %v132
    %v136 = vor.u32 %v134, %v135
    %v137 = vshll.u32 2475754826, %v131
    %v138 = vshrl.u32 2131351028, %v132
    %v139 = vor.u32 %v137, %v138
    %v140 = vshll.u32 2131351028, %v131
    %v141 = vshrl.u32 2102212464, %v132
    %v142 = vor.u32 %v140, %v141
    %v143 = vshll.u32 2102212464, %v131
    %v144 = vshrl.u32 920167782, %v132
    %v145 = vor.u32 %v143, %v144
    %v146 = vshll.u32 920167782, %v131
    %v147 = vshrl.u32 1326507024, %v132
    %v148 = vor.u32 %v146, %v147
    %vm149 = vcmp.lt.s32.totalorder %v130, 1
    %vm150 = vcmp.lt.s32.totalorder %v130, 2
    %vm151 = vcmp.lt.s32.totalorder %v130, 3
    %vm152 = vcmp.lt.s32.totalorder %v130, 4
    %v153 = vsel %vm149, %v133, %v136
    %v154 = vsel %vm152, %v142, 2102212464
    %v155 = vsel %vm151, %v139, %v154
    %v156 = vsel %vm150, %v153, %v155
    %v157 = vsel %vm149, %v136, %v139
    %v158 = vsel %vm152, %v145, 920167782
    %v159 = vsel %vm151, %v142, %v158
    %v160 = vsel %vm150, %v157, %v159
    %v161 = vsel %vm149, %v139, %v142
    %v162 = vsel %vm152, %v148, 1326507024
    %v163 = vsel %vm151, %v145, %v162
    %v164 = vsel %vm150, %v161, %v163
    %v165 = vshll.u32 %v125, 8
    %v166 = vmul.u32.u64.compose %v165, %v164
    %v167 = vextract.low.u32 %v166
    %v168 = vextract.high.u32 %v166
    %v169 = vmul.u32.u64.compose %v165, %v160
    %v170 = vextract.low.u32 %v169
    %v171 = vextract.high.u32 %v169
    %v172 = vmul.u32 %v165, %v156
    %v173 = vadd.s32 %v168, %v170
    %vm174 = vc.u32 %v168, %v170
    %v175 = vadd.s32 %v171, 1
    %v176 = vsel %vm174, %v175, %v171
    %v177 = vadd.s32 %v172, %v176
    %v178 = vadd.s32 %v177, 536870912
    %v179 = vshrl.u32 %v178, 30
    %v180 = vshll.u32 %v179, 30
    %v181 = vsub.s32 %v177, %v180
    %vm182 = vcmp.lt.s32.totalorder %v181, 0
    %v183 = vsub.s32 0, %v181
    %v184 = vsel %vm182, %v183, %v181
    %v185 = vclz %v184
    %v186 = vsub.s32 %v185, 2
    %vm187 = vcmp.gt.s32.totalorder 0, %v186
    %v188 = vsel %vm187, 0, %v186
    %v189 = vsub.s32 32, %v188
    %v190 = vshll.u32 %v181, %v188
    %v191 = vshrl.u32 %v173, %v189
    %v192 = vor.u32 %v190, %v191
    %v193 = vsub.s32 4294967266, %v188
    %v194 = vadd.s32 %v193, 127
    %v195 = vshll.u32 %v194, 23
    %v196 = vor.u32 4788187, %v195
    %v197 = vand.u32 2147483647, %v196
    %v199 = vcvt.s32.f32 %v192
    %v200 = vmul.f32 %v199, %v197
    %v201 = vxor.u32 %v200, 2147483648
    %v202 = vsel %vm119, %v201, %v200
    %v203 = vsub.s32 4, %v179
    %v204 = vsel %vm119, %v203, %v179
    %v205 = vsel %vm118, %v115, %v202
    %v206 = vsel %vm118, 0, %v204
    %v207 = vcosq.f32.pop %v205
    %v208 = vsinq.f32.pop %v205
    %vm209 = vweird.f32 %v115
    %v210 = vand.u32 %v206, 3
    %vm211 = vcmp.lt.s32.totalorder %v210, 2
    %vm212 = vcmp.eq.s32.totalorder %v210, 0
    %v213 = vxor.u32 %v208, 2147483648
    %v214 = vsel %vm212, %v207, %v213
    %vm215 = vcmp.eq.s32.totalorder %v210, 2
    %v216 = vxor.u32 %v207, 2147483648
    %v217 = vsel %vm215, %v216, %v208
    %v218 = vsel %vm211, %v214, %v217
    %v219 = vsel %vm209, nan, %v218
    %v220 = vand.u32 2147483647, %v116
    %vm221 = vcmp.le.f32.partialorder %v220, 0.7853982
    %vm222 = vcmp.lt.s32.totalorder %v116, 0
    %v223 = vand.u32 %v116, 2139095040
    %v224 = vshrl.u32 %v223, 23
    %v225 = vsub.s32 %v224, 127
    %v226 = vand.u32 2147483647, %v116
    %v227 = vand.u32 %v226, 8388607
    %v228 = vor.u32 %v227, 8388608
    %v229 = vsub.s32 0, %v228
    %v230 = vadd.s32 %v225, 1
    %vm231 = vcmp.gt.s32.totalorder %v230, 0
    %v232 = vsel %vm231, %v230, 0
    %v233 = vshrl.u32 %v232, 5
    %v234 = vand.u32 %v232, 31
    %v235 = vsub.s32 32, %v234
    %v236 = vshrl.u32 683565275, %v235
    %v237 = vshll.u32 683565275, %v234
    %v238 = vshrl.u32 2475754826, %v235
    %v239 = vor.u32 %v237, %v238
    %v240 = vshll.u32 2475754826, %v234
    %v241 = vshrl.u32 2131351028, %v235
    %v242 = vor.u32 %v240, %v241
    %v243 = vshll.u32 2131351028, %v234
    %v244 = vshrl.u32 2102212464, %v235
    %v245 = vor.u32 %v243, %v244
    %v246 = vshll.u32 2102212464, %v234
    %v247 = vshrl.u32 920167782, %v235
    %v248 = vor.u32 %v246, %v247
    %v249 = vshll.u32 920167782, %v234
    %v250 = vshrl.u32 1326507024, %v235
    %v251 = vor.u32 %v249, %v250
    %vm252 = vcmp.lt.s32.totalorder %v233, 1
    %vm253 = vcmp.lt.s32.totalorder %v233, 2
    %vm254 = vcmp.lt.s32.totalorder %v233, 3
    %vm255 = vcmp.lt.s32.totalorder %v233, 4
    %v256 = vsel %vm252, %v236, %v239
    %v257 = vsel %vm255, %v245, 2102212464
    %v258 = vsel %vm254, %v242, %v257
    %v259 = vsel %vm253, %v256, %v258
    %v260 = vsel %vm252, %v239, %v242
    %v261 = vsel %vm255, %v248, 920167782
    %v262 = vsel %vm254, %v245, %v261
    %v263 = vsel %vm253, %v260, %v262
    %v264 = vsel %vm252, %v242, %v245
    %v265 = vsel %vm255, %v251, 1326507024
    %v266 = vsel %vm254, %v248, %v265
    %v267 = vsel %vm253, %v264, %v266
    %v268 = vshll.u32 %v228, 8
    %v269 = vmul.u32.u64.compose %v268, %v267
    %v270 = vextract.low.u32 %v269
    %v271 = vextract.high.u32 %v269
    %v272 = vmul.u32.u64.compose %v268, %v263
    %v273 = vextract.low.u32 %v272
    %v274 = vextract.high.u32 %v272
    %v275 = vmul.u32 %v268, %v259
    %v276 = vadd.s32 %v271, %v273
    %vm277 = vc.u32 %v271, %v273
    %v278 = vadd.s32 %v274, 1
    %v279 = vsel %vm277, %v278, %v274
    %v280 = vadd.s32 %v275, %v279
    %v281 = vadd.s32 %v280, 536870912
    %v282 = vshrl.u32 %v281, 30
    %v283 = vshll.u32 %v282, 30
    %v284 = vsub.s32 %v280, %v283
    %vm285 = vcmp.lt.s32.totalorder %v284, 0
    %v286 = vsub.s32 0, %v284
    %v287 = vsel %vm285, %v286, %v284
    %v288 = vclz %v287
    %v289 = vsub.s32 %v288, 2
    %vm290 = vcmp.gt.s32.totalorder 0, %v289
    %v291 = vsel %vm290, 0, %v289
    %v292 = vsub.s32 32, %v291
    %v293 = vshll.u32 %v284, %v291
    %v294 = vshrl.u32 %v276, %v292
    %v295 = vor.u32 %v293, %v294
    %v296 = vsub.s32 4294967266, %v291
    %v297 = vadd.s32 %v296, 127
    %v298 = vshll.u32 %v297, 23
    %v299 = vor.u32 4788187, %v298
    %v300 = vand.u32 2147483647, %v299
    %v302 = vcvt.s32.f32 %v295
    %v303 = vmul.f32 %v302, %v300
    %v304 = vxor.u32 %v303, 2147483648
    %v305 = vsel %vm222, %v304, %v303
    %v306 = vsub.s32 4, %v282
    %v307 = vsel %vm222, %v306, %v282
    %v308 = vsel %vm221, %v116, %v305
    %v309 = vsel %vm221, 0, %v307
    %v310 = vcosq.f32.pop %v308
    %v311 = vsinq.f32.pop %v308
    %vm312 = vweird.f32 %v116
    %v313 = vand.u32 %v309, 3
    %vm314 = vcmp.lt.s32.totalorder %v313, 2
    %vm315 = vcmp.eq.s32.totalorder %v313, 0
    %v316 = vxor.u32 %v311, 2147483648
    %v317 = vsel %vm315, %v310, %v316
    %vm318 = vcmp.eq.s32.totalorder %v313, 2
    %v319 = vxor.u32 %v310, 2147483648
    %v320 = vsel %vm318, %v319, %v311
    %v321 = vsel %vm314, %v317, %v320
    %v322 = vsel %vm312, nan, %v321
    %v323 = vld [vmem:[%s3] sm:$0xff]
    %v324 = vld [vmem:[%s3 + $0x8] sm:$0xff]
    %v325 = vld [vmem:[%s3 + $0x10] sm:$0xff]
    %v326 = vld [vmem:[%s3 + $0x18] sm:$0xff]
    %v327 = vld [vmem:[%s3 + $0x20] sm:$0xff]
    %v328 = vld [vmem:[%s3 + $0x28] sm:$0xff]
    %v329 = vld [vmem:[%s3 + $0x30] sm:$0xff]
    %v330 = vld [vmem:[%s3 + $0x38] sm:$0xff]
    %v331 = vld [vmem:[#allocation9] sm:$0x1]
    %v333 = vlaneseq
    %v334 = vshrl.u32 %v333, 7
    %v335 = vsub.s32 0, %v334
    %v336 = vrot.slane %v331, %v335
    %vm338 = vcmask 523264
    %v340 = vsel %vm338, %v219, 0
    %v343 = vsel %vm338, %v322, 0
    %345 = vmatprep.subr.mxu0 0.0
    %346 = vmatpush1.msra.mxu0 0.0
    %347 = vmatprep.subr.mxu0 0.0
    %348 = vmatpush1.msra.mxu0 0.0
    %349 = vmatprep.subr.mxu0 0.0
    %350 = vmatpush1.msra.mxu0 0.0
    %351 = vmatprep.subr.mxu0 0.0
    %352 = vmatpush1.msra.mxu0 0.0
    %353 = vmatprep.subr.mxu0 0.0
    %354 = vmatpush1.msra.mxu0 0.0
    %355 = vmatprep.subr.mxu0 0.0
    %356 = vmatpush1.msra.mxu0 0.0
    %357 = vmatprep.subr.mxu0 0.0
    %358 = vmatpush1.msra.mxu0 0.0
    %359 = vmatprep.subr.mxu0 0.0
    %360 = vmatpush1.msra.mxu0 0.0
    %361 = vmatprep.subr.mxu0 0.0
    %362 = vmatpush1.msra.mxu0 %v330
    %363 = vmatprep.subr.mxu0 0.0
    %364 = vmatpush1.msra.mxu0 %v329
    %365 = vmatprep.subr.mxu0 0.0
    %366 = vmatpush1.msra.mxu0 %v328
    %367 = vmatprep.subr.mxu0 0.0
    %368 = vmatpush1.msra.mxu0 %v327
    %369 = vmatprep.subr.mxu0 0.0
    %370 = vmatpush1.msra.mxu0 %v326
    %371 = vmatprep.subr.mxu0 0.0
    %372 = vmatpush1.msra.mxu0 %v325
    %373 = vmatprep.subr.mxu0 0.0
    %374 = vmatpush1.msra.mxu0 %v324
    %375 = vmatprep.subr.mxu0 0.0
    %376 = vmatpush1.msra.mxu0 %v323
    %377 = vmatprep.subr.mxu0 0.0
    %378 = vmatpush2.msra.mxu0 0.0
    %379 = vmatprep.subr.mxu0 0.0
    %380 = vmatpush2.msra.mxu0 0.0
    %381 = vmatprep.subr.mxu0 0.0
    %382 = vmatpush2.msra.mxu0 0.0
    %383 = vmatprep.subr.mxu0 0.0
    %384 = vmatpush2.msra.mxu0 0.0
    %385 = vmatprep.subr.mxu0 0.0
    %386 = vmatpush2.msra.mxu0 0.0
    %387 = vmatprep.subr.mxu0 0.0
    %388 = vmatpush2.msra.mxu0 0.0
    %389 = vmatprep.subr.mxu0 0.0
    %390 = vmatpush2.msra.mxu0 0.0
    %391 = vmatprep.subr.mxu0 0.0
    %392 = vmatpush2.msra.mxu0 0.0
    %393 = vmatprep.subr.mxu0 0.0
    %394 = vmatpush2.msra.mxu0 0.0
    %395 = vmatprep.subr.mxu0 0.0
    %396 = vmatpush2.msra.mxu0 0.0
    %397 = vmatprep.subr.mxu0 0.0
    %398 = vmatpush2.msra.mxu0 0.0
    %399 = vmatprep.subr.mxu0 0.0
    %400 = vmatpush2.msra.mxu0 0.0
    %401 = vmatprep.subr.mxu0 0.0
    %402 = vmatpush2.msra.mxu0 0.0
    %403 = vmatprep.subr.mxu0 0.0
    %404 = vmatpush2.msra.mxu0 0.0
    %405 = vmatprep.subr.mxu0 0.0
    %406 = vmatpush2.msra.mxu0 0.0
    %407 = vmatprep.subr.mxu0 0.0
    %408 = vmatpush2.msra.mxu0 0.0
    %409 = vmatprep.mubr.f32.mxu0 0.0
    %410 = vmatmul.mubr.f32.gmra.mxu0 %v340
    %v411 = vpop.f32.mrf.mxu0
    %v412 = vadd.f32 %v336, %v411
    %v413 = vpop.f32.mrf.mxu0
    %414 = vmatprep.mubr.f32.mxu0 0.0
    %415 = vmatmul.mubr.f32.gmra.mxu0 %v343
    %v416 = vpop.f32.mrf.mxu0
    %v417 = vadd.f32 %v336, %v416
    %v418 = vpop.f32.mrf.mxu0
    %419 = vdwg.mxu0
    %s420 = sld [smem:[#allocation2]]
    %vm421 = vcmp.gt.f32.partialorder %v412, 0.0
    %vm422 = vcmp.gt.f32.partialorder %v417, 0.0
    %v423 = vstv %s420
    %v424 = vmul.f32 %v423, %v412
    %v425 = vmul.f32 %v423, %v417
    %v426 = vsel %vm421, %v412, %v424
    %v427 = vsel %vm422, %v417, %v425
    %v428 = vld [vmem:[%s5] sm:$0xff]
    %v429 = vld [vmem:[%s5 + $0x8] sm:$0xff]
    %v430 = vld [vmem:[%s5 + $0x10] sm:$0xff]
    %v431 = vld [vmem:[%s5 + $0x18] sm:$0xff]
    %v432 = vld [vmem:[%s5 + $0x20] sm:$0xff]
    %v433 = vld [vmem:[%s5 + $0x28] sm:$0xff]
    %v434 = vld [vmem:[%s5 + $0x30] sm:$0xff]
    %v435 = vld [vmem:[%s5 + $0x38] sm:$0xff]
    %v436 = vld [vmem:[#allocation10] sm:$0x1]
    %v438 = vlaneseq
    %v439 = vshrl.u32 %v438, 7
    %v440 = vsub.s32 0, %v439
    %v441 = vrot.slane %v436, %v440
    %v444 = vsel %vm338, %v426, 0
    %v447 = vsel %vm338, %v427, 0
    %449 = vmatprep.subr.mxu0 0.0
    %450 = vmatpush1.msra.mxu0 0.0
    %451 = vmatprep.subr.mxu0 0.0
    %452 = vmatpush1.msra.mxu0 0.0
    %453 = vmatprep.subr.mxu0 0.0
    %454 = vmatpush1.msra.mxu0 0.0
    %455 = vmatprep.subr.mxu0 0.0
    %456 = vmatpush1.msra.mxu0 0.0
    %457 = vmatprep.subr.mxu0 0.0
    %458 = vmatpush1.msra.mxu0 0.0
    %459 = vmatprep.subr.mxu0 0.0
    %460 = vmatpush1.msra.mxu0 0.0
    %461 = vmatprep.subr.mxu0 0.0
    %462 = vmatpush1.msra.mxu0 0.0
    %463 = vmatprep.subr.mxu0 0.0
    %464 = vmatpush1.msra.mxu0 0.0
    %465 = vmatprep.subr.mxu0 0.0
    %466 = vmatpush1.msra.mxu0 %v435
    %467 = vmatprep.subr.mxu0 0.0
    %468 = vmatpush1.msra.mxu0 %v434
    %469 = vmatprep.subr.mxu0 0.0
    %470 = vmatpush1.msra.mxu0 %v433
    %471 = vmatprep.subr.mxu0 0.0
    %472 = vmatpush1.msra.mxu0 %v432
    %473 = vmatprep.subr.mxu0 0.0
    %474 = vmatpush1.msra.mxu0 %v431
    %475 = vmatprep.subr.mxu0 0.0
    %476 = vmatpush1.msra.mxu0 %v430
    %477 = vmatprep.subr.mxu0 0.0
    %478 = vmatpush1.msra.mxu0 %v429
    %479 = vmatprep.subr.mxu0 0.0
    %480 = vmatpush1.msra.mxu0 %v428
    %481 = vmatprep.subr.mxu0 0.0
    %482 = vmatpush2.msra.mxu0 0.0
    %483 = vmatprep.subr.mxu0 0.0
    %484 = vmatpush2.msra.mxu0 0.0
    %485 = vmatprep.subr.mxu0 0.0
    %486 = vmatpush2.msra.mxu0 0.0
    %487 = vmatprep.subr.mxu0 0.0
    %488 = vmatpush2.msra.mxu0 0.0
    %489 = vmatprep.subr.mxu0 0.0
    %490 = vmatpush2.msra.mxu0 0.0
    %491 = vmatprep.subr.mxu0 0.0
    %492 = vmatpush2.msra.mxu0 0.0
    %493 = vmatprep.subr.mxu0 0.0
    %494 = vmatpush2.msra.mxu0 0.0
    %495 = vmatprep.subr.mxu0 0.0
    %496 = vmatpush2.msra.mxu0 0.0
    %497 = vmatprep.subr.mxu0 0.0
    %498 = vmatpush2.msra.mxu0 0.0
    %499 = vmatprep.subr.mxu0 0.0
    %500 = vmatpush2.msra.mxu0 0.0
    %501 = vmatprep.subr.mxu0 0.0
    %502 = vmatpush2.msra.mxu0 0.0
    %503 = vmatprep.subr.mxu0 0.0
    %504 = vmatpush2.msra.mxu0 0.0
    %505 = vmatprep.subr.mxu0 0.0
    %506 = vmatpush2.msra.mxu0 0.0
    %507 = vmatprep.subr.mxu0 0.0
    %508 = vmatpush2.msra.mxu0 0.0
    %509 = vmatprep.subr.mxu0 0.0
    %510 = vmatpush2.msra.mxu0 0.0
    %511 = vmatprep.subr.mxu0 0.0
    %512 = vmatpush2.msra.mxu0 0.0
    %513 = vmatprep.mubr.f32.mxu0 0.0
    %514 = vmatmul.mubr.f32.gmra.mxu0 %v444
    %v515 = vpop.f32.mrf.mxu0
    %v516 = vadd.f32 %v441, %v515
    %v517 = vpop.f32.mrf.mxu0
    %518 = vmatprep.mubr.f32.mxu0 0.0
    %519 = vmatmul.mubr.f32.gmra.mxu0 %v447
    %v520 = vpop.f32.mrf.mxu0
    %v521 = vadd.f32 %v441, %v520
    %v522 = vpop.f32.mrf.mxu0
    %523 = vdwg.mxu0
    %v524 = vld [vmem:[#allocation4] sm:$0xff]
    %v525 = vld [vmem:[#allocation4 + $0x8] sm:$0xff]
    %v526 = vadd.f32 %v516, 1.0
    %v527 = vadd.f32 %v521, 1.0
    %v528 = vmul.f32 %v524, %v526
    %v529 = vmul.f32 %v525, %v527
    %v530 = vld [vmem:[%s7] sm:$0xff]
    %v531 = vld [vmem:[%s7 + $0x8] sm:$0xff]
    %v532 = vld [vmem:[%s7 + $0x10] sm:$0xff]
    %v533 = vld [vmem:[%s7 + $0x18] sm:$0xff]
    %v534 = vld [vmem:[%s8] sm:$0x1]
    %v536 = vlaneseq
    %v537 = vshrl.u32 %v536, 7
    %v538 = vsub.s32 0, %v537
    %v539 = vrot.slane %v534, %v538
    %vm541 = vcmask 261120
    %v543 = vsel %vm541, %v528, 0
    %v546 = vsel %vm541, %v529, 0
    %548 = vmatprep.subr.mxu0 0.0
    %549 = vmatpush1.msra.mxu0 0.0
    %550 = vmatprep.subr.mxu0 0.0
    %551 = vmatpush1.msra.mxu0 0.0
    %552 = vmatprep.subr.mxu0 0.0
    %553 = vmatpush1.msra.mxu0 0.0
    %554 = vmatprep.subr.mxu0 0.0
    %555 = vmatpush1.msra.mxu0 0.0
    %556 = vmatprep.subr.mxu0 0.0
    %557 = vmatpush1.msra.mxu0 0.0
    %558 = vmatprep.subr.mxu0 0.0
    %559 = vmatpush1.msra.mxu0 0.0
    %560 = vmatprep.subr.mxu0 0.0
    %561 = vmatpush1.msra.mxu0 0.0
    %562 = vmatprep.subr.mxu0 0.0
    %563 = vmatpush1.msra.mxu0 0.0
    %564 = vmatprep.subr.mxu0 0.0
    %565 = vmatpush1.msra.mxu0 0.0
    %566 = vmatprep.subr.mxu0 0.0
    %567 = vmatpush1.msra.mxu0 0.0
    %568 = vmatprep.subr.mxu0 0.0
    %569 = vmatpush1.msra.mxu0 0.0
    %570 = vmatprep.subr.mxu0 0.0
    %571 = vmatpush1.msra.mxu0 0.0
    %572 = vmatprep.subr.mxu0 0.0
    %573 = vmatpush1.msra.mxu0 %v533
    %574 = vmatprep.subr.mxu0 0.0
    %575 = vmatpush1.msra.mxu0 %v532
    %576 = vmatprep.subr.mxu0 0.0
    %577 = vmatpush1.msra.mxu0 %v531
    %578 = vmatprep.subr.mxu0 0.0
    %579 = vmatpush1.msra.mxu0 %v530
    %580 = vmatprep.subr.mxu0 0.0
    %581 = vmatpush2.msra.mxu0 0.0
    %582 = vmatprep.subr.mxu0 0.0
    %583 = vmatpush2.msra.mxu0 0.0
    %584 = vmatprep.subr.mxu0 0.0
    %585 = vmatpush2.msra.mxu0 0.0
    %586 = vmatprep.subr.mxu0 0.0
    %587 = vmatpush2.msra.mxu0 0.0
    %588 = vmatprep.subr.mxu0 0.0
    %589 = vmatpush2.msra.mxu0 0.0
    %590 = vmatprep.subr.mxu0 0.0
    %591 = vmatpush2.msra.mxu0 0.0
    %592 = vmatprep.subr.mxu0 0.0
    %593 = vmatpush2.msra.mxu0 0.0
    %594 = vmatprep.subr.mxu0 0.0
    %595 = vmatpush2.msra.mxu0 0.0
    %596 = vmatprep.subr.mxu0 0.0
    %597 = vmatpush2.msra.mxu0 0.0
    %598 = vmatprep.subr.mxu0 0.0
    %599 = vmatpush2.msra.mxu0 0.0
    %600 = vmatprep.subr.mxu0 0.0
    %601 = vmatpush2.msra.mxu0 0.0
    %602 = vmatprep.subr.mxu0 0.0
    %603 = vmatpush2.msra.mxu0 0.0
    %604 = vmatprep.subr.mxu0 0.0
    %605 = vmatpush2.msra.mxu0 0.0
    %606 = vmatprep.subr.mxu0 0.0
    %607 = vmatpush2.msra.mxu0 0.0
    %608 = vmatprep.subr.mxu0 0.0
    %609 = vmatpush2.msra.mxu0 0.0
    %610 = vmatprep.subr.mxu0 0.0
    %611 = vmatpush2.msra.mxu0 0.0
    %612 = vmatprep.mubr.f32.mxu0 0.0
    %613 = vmatmul.mubr.f32.gmra.mxu0 %v543
    %v614 = vpop.f32.mrf.mxu0
    %v615 = vadd.f32 %v539, %v614
    %v616 = vpop.f32.mrf.mxu0
    %617 = vmatprep.mubr.f32.mxu0 0.0
    %618 = vmatmul.mubr.f32.gmra.mxu0 %v546
    %v619 = vpop.f32.mrf.mxu0
    %v620 = vadd.f32 %v539, %v619
    %v621 = vpop.f32.mrf.mxu0
    %622 = vdwg.mxu0
    %s623 = sld [smem:[#allocation3]]
    %vm624 = vcmp.gt.f32.partialorder %v615, 0.0
    %vm625 = vcmp.gt.f32.partialorder %v620, 0.0
    %v626 = vstv %s623
    %v627 = vmul.f32 %v626, %v615
    %v628 = vmul.f32 %v626, %v620
    %v629 = vsel %vm624, %v615, %v627
    %v630 = vsel %vm625, %v620, %v628
    %v631 = vld [vmem:[%s9] sm:$0xff]
    %v632 = vld [vmem:[%s10] sm:$0xff]
    %634 = vset.pattern.permute.xlu0 0
    %635 = vperm.xlu0 %634, %v632
    %v636 = vpop.permute.xlu0 %635
    %v639 = vsel %vm541, %v631, 0
    %v642 = vsel %vm541, %v629, 0
    %v645 = vsel %vm541, %v630, 0
    %647 = vmatprep.subr.mxu0 0.0
    %648 = vmatpush1.xpose.msra.mxu0 0.0
    %649 = vmatprep.subr.mxu0 0.0
    %650 = vmatpush1.xpose.msra.mxu0 0.0
    %651 = vmatprep.subr.mxu0 0.0
    %652 = vmatpush1.xpose.msra.mxu0 0.0
    %653 = vmatprep.subr.mxu0 0.0
    %654 = vmatpush1.xpose.msra.mxu0 0.0
    %655 = vmatprep.subr.mxu0 0.0
    %656 = vmatpush1.xpose.msra.mxu0 0.0
    %657 = vmatprep.subr.mxu0 0.0
    %658 = vmatpush1.xpose.msra.mxu0 0.0
    %659 = vmatprep.subr.mxu0 0.0
    %660 = vmatpush1.xpose.msra.mxu0 0.0
    %661 = vmatprep.subr.mxu0 0.0
    %662 = vmatpush1.xpose.msra.mxu0 0.0
    %663 = vmatprep.subr.mxu0 0.0
    %664 = vmatpush1.xpose.msra.mxu0 0.0
    %665 = vmatprep.subr.mxu0 0.0
    %666 = vmatpush1.xpose.msra.mxu0 0.0
    %667 = vmatprep.subr.mxu0 0.0
    %668 = vmatpush1.xpose.msra.mxu0 0.0
    %669 = vmatprep.subr.mxu0 0.0
    %670 = vmatpush1.xpose.msra.mxu0 0.0
    %671 = vmatprep.subr.mxu0 0.0
    %672 = vmatpush1.xpose.msra.mxu0 0.0
    %673 = vmatprep.subr.mxu0 0.0
    %674 = vmatpush1.xpose.msra.mxu0 0.0
    %675 = vmatprep.subr.mxu0 0.0
    %676 = vmatpush1.xpose.msra.mxu0 %v645
    %677 = vmatprep.subr.mxu0 0.0
    %678 = vmatpush1.xpose.msra.mxu0 %v642
    %679 = vmatprep.subr.mxu0 0.0
    %680 = vmatpush2.xpose.msra.mxu0 0.0
    %681 = vmatprep.subr.mxu0 0.0
    %682 = vmatpush2.xpose.msra.mxu0 0.0
    %683 = vmatprep.subr.mxu0 0.0
    %684 = vmatpush2.xpose.msra.mxu0 0.0
    %685 = vmatprep.subr.mxu0 0.0
    %686 = vmatpush2.xpose.msra.mxu0 0.0
    %687 = vmatprep.subr.mxu0 0.0
    %688 = vmatpush2.xpose.msra.mxu0 0.0
    %689 = vmatprep.subr.mxu0 0.0
    %690 = vmatpush2.xpose.msra.mxu0 0.0
    %691 = vmatprep.subr.mxu0 0.0
    %692 = vmatpush2.xpose.msra.mxu0 0.0
    %693 = vmatprep.subr.mxu0 0.0
    %694 = vmatpush2.xpose.msra.mxu0 0.0
    %695 = vmatprep.subr.mxu0 0.0
    %696 = vmatpush2.xpose.msra.mxu0 0.0
    %697 = vmatprep.subr.mxu0 0.0
    %698 = vmatpush2.xpose.msra.mxu0 0.0
    %699 = vmatprep.subr.mxu0 0.0
    %700 = vmatpush2.xpose.msra.mxu0 0.0
    %701 = vmatprep.subr.mxu0 0.0
    %702 = vmatpush2.xpose.msra.mxu0 0.0
    %703 = vmatprep.subr.mxu0 0.0
    %704 = vmatpush2.xpose.msra.mxu0 0.0
    %705 = vmatprep.subr.mxu0 0.0
    %706 = vmatpush2.xpose.msra.mxu0 0.0
    %707 = vmatprep.subr.mxu0 0.0
    %708 = vmatpush2.xpose.msra.mxu0 0.0
    %709 = vmatprep.subr.mxu0 0.0
    %710 = vmatpush2.xpose.msra.mxu0 0.0
    %711 = vmatprep.mubr.f32.mxu0 0.0
    %712 = vmatmul.mubr.f32.gmra.mxu0 %v639
    %v713 = vpop.f32.mrf.mxu0
    %v714 = vadd.f32 %v636, %v713
    %v715 = vpop.f32.mrf.mxu0
    %716 = vdwg.mxu0
    %vm717 = vcmask 130048
    %718 = vst.msk [vmem:[#allocation12] sm:$0xff] %vm717, %v714
    // Predicated region
    $region70: #{tpu_custom_call.1} parent=1 // pred_check
      _
    $region71: #{tpu_custom_call.1} parent=1 // pred_check_branch
      %720 = sbr.rel (0) target = $region73
    $region72: #{tpu_custom_call.1} parent=1 // pred_region
      %s722 = ssub.s32 128, 128
      %723 = vsyncadd [#allocation6], %s722
      %s725 = sshll.u32 [#allocation12], 4
      %s726 = int_to_ptr.vmem [resolvable:$true] %s725
      %728 = dma.vmem_to_hbm [thread:$0]  %s726, 128, %s13, [#allocation6]
    $region73: #{tpu_custom_call.1} parent=1 // pred_fallthru
      _
    // Predicated region
    $region74: #{tpu_custom_call.1} parent=1 // pred_check
      _
    $region75: #{tpu_custom_call.1} parent=1 // pred_check_branch
      %730 = sbr.rel (0) target = $region77
    $region76: #{tpu_custom_call.1} parent=1 // pred_region
      %731 = dma.done [#allocation6], 128
    $region77: #{tpu_custom_call.1} parent=1 // pred_fallthru
      _
    %732 = vsyncpa [#allocation5], 1
    %733 = vsyncpa [#allocation8], 1
    %734 = vsyncpa [#allocation11], 1
    %735 = vsyncpa [#allocation6], 1

</llo_original>
